<compile_context>
chip_gen: v6e
topology: v6e:2x2x1
jax: 0.10.0
libtpu: 0.0.40
codegen_flags: <defaults>
</compile_context>

<pallas_src>
import functools
import math

import jax
import jax.numpy as jnp
from jax.experimental import pallas as pl
from jax.experimental.pallas import tpu as pltpu


# ----------------------------------------------------------------------------
# Helpers
# ----------------------------------------------------------------------------
def _cdiv(a, b):
    return -(-a // b)


def _round_up(x, m):
    return _cdiv(x, m) * m


def _vmem_capacity_bytes():
    try:
        info = pltpu.get_tpu_info()
        cap = getattr(info, "vmem_capacity_bytes", None)
        if cap:
            return int(cap)
    except Exception:
        pass
    return 64 * 1024 * 1024  # conservative (v7x per-TC)


def _choose_row_tile(M, target):
    """Sublane-aligned row tile: prefer `target`, shrink for small M, and keep
    >= 2 tiles on the parallel row axis whenever M allows (v7x megacore)."""
    tm = min(target, _round_up(M, 8))
    tm = max(8, (tm // 8) * 8)
    if _round_up(M, 8) >= 16:
        while tm > 8 and _cdiv(M, tm) < 2:
            tm = max(8, ((tm // 2) // 8) * 8)
    return tm


# ----------------------------------------------------------------------------
# Kernel bodies
# ----------------------------------------------------------------------------
def _silu_layernorm(h, g_ref, beta_ref, eps):
    """h: [tm, N] f32.  Returns LayerNorm(SiLU(h)) in f32."""
    h = h * jax.nn.sigmoid(h)                       # SiLU (sigmoid -> EUP)
    mean = jnp.mean(h, axis=-1, keepdims=True)
    c = h - mean
    var = jnp.mean(c * c, axis=-1, keepdims=True)
    inv = jax.lax.rsqrt(var + eps)                  # EUP, cheap
    return c * inv * g_ref[...].astype(jnp.float32) + beta_ref[...].astype(jnp.float32)


def _resident_kernel(x_ref, w_ref, b_ref, g_ref, beta_ref, o_ref, *, eps):
    """grid = (M//tm,).  Full [K, N] weight resident in VMEM (constant index)."""
    x = x_ref[...]
    w = w_ref[...]
    if x.dtype != w.dtype:
        x = x.astype(w.dtype)                       # tiny vs. the W slab
    acc = jnp.dot(x, w, preferred_element_type=jnp.float32)
    acc = acc + b_ref[...].astype(jnp.float32)
    o_ref[...] = _silu_layernorm(acc, g_ref, beta_ref, eps).astype(o_ref.dtype)


def _kstream_kernel_f32out(x_ref, w_ref, b_ref, g_ref, beta_ref, o_ref, *, eps):
    """grid = (M//tm, K//tk), f32 output: accumulate directly into o_ref
    (its block index is constant across K, so it stays resident)."""
    k = pl.program_id(1)

    @pl.when(k == 0)
    def _init():
        o_ref[...] = jnp.zeros_like(o_ref)

    x = x_ref[...]
    w = w_ref[...]
    if x.dtype != w.dtype:
        x = x.astype(w.dtype)
    o_ref[...] += jnp.dot(x, w, preferred_element_type=jnp.float32)

    @pl.when(k == pl.num_programs(1) - 1)
    def _finalize():
        acc = o_ref[...] + b_ref[...].astype(jnp.float32)
        o_ref[...] = _silu_layernorm(acc, g_ref, beta_ref, eps).astype(o_ref.dtype)


def _kstream_kernel_scratch(x_ref, w_ref, b_ref, g_ref, beta_ref, o_ref, acc_ref,
                            *, eps):
    """grid = (M//tm, K//tk), non-f32 output: f32 VMEM accumulator scratch."""
    k = pl.program_id(1)

    @pl.when(k == 0)
    def _init():
        acc_ref[...] = jnp.zeros_like(acc_ref)

    x = x_ref[...]
    w = w_ref[...]
    if x.dtype != w.dtype:
        x = x.astype(w.dtype)
    acc_ref[...] += jnp.dot(x, w, preferred_element_type=jnp.float32)

    @pl.when(k == pl.num_programs(1) - 1)
    def _finalize():
        acc = acc_ref[...] + b_ref[...].astype(jnp.float32)
        o_ref[...] = _silu_layernorm(acc, g_ref, beta_ref, eps).astype(o_ref.dtype)


# ----------------------------------------------------------------------------
# Wrapper
# ----------------------------------------------------------------------------
def prediction_head_transform(x, w, b, gamma, beta, *, eps=1e-5,
                              out_dtype=None, tm=None, tk=None,
                              force_kstream=False):
    """y = LayerNorm(SiLU(x @ w + b)).

    x:               [..., d_model]
    w:               [d_model, d_model]  (torch weight.T; pre-cast, e.g. bf16)
    b, gamma, beta:  [d_model]
    out_dtype:       output dtype (default: x.dtype).  bf16 halves out VMEM/HBM.
    """
    orig_shape = x.shape
    K = orig_shape[-1]
    assert w.shape[0] == K, (w.shape, K)
    N = w.shape[1]
    M = int(math.prod(orig_shape[:-1])) if len(orig_shape) > 1 else 1
    out_dtype = jnp.dtype(x.dtype if out_dtype is None else out_dtype)

    x2 = x.reshape(M, K)
    xbytes = x2.dtype.itemsize
    wbytes = w.dtype.itemsize
    obytes = out_dtype.itemsize

    cap = _vmem_capacity_bytes()
    budget = int(cap * 0.70)

    def resident_bytes(tm_):
        # conservative: count W with double-buffer accounting
        return (2 * K * N * wbytes + 2 * tm_ * K * xbytes
                + 2 * tm_ * N * obytes + 6 * N * 4)

    def kstream_bytes(tm_, tk_, with_acc):
        return (2 * tm_ * tk_ * xbytes + 2 * tk_ * N * wbytes
                + 2 * tm_ * N * obytes + (tm_ * N * 4 if with_acc else 0)
                + 6 * N * 4)

    tm_target = 512 if tm is None else tm
    tm_ = _choose_row_tile(M, tm_target)

    can_tile_k = (K % 128 == 0) and (K > 128)
    if force_kstream and (K % 128 == 0):
        use_resident = False
    else:
        use_resident = (not can_tile_k) or (resident_bytes(min(tm_, 128)) <= budget)

    b2 = b.reshape(1, N).astype(jnp.float32)
    g2 = gamma.reshape(1, N).astype(jnp.float32)
    beta2 = beta.reshape(1, N).astype(jnp.float32)

    if use_resident:
        while tm_ > 8 and resident_bytes(tm_) > budget:
            tm_ = max(8, ((tm_ // 2) // 8) * 8)
        needed = resident_bytes(tm_)
    else:
        tk_target = 512 if tk is None else tk
        tk_ = max(128, (min(tk_target, K) // 128) * 128)
        while K % tk_ != 0:
            tk_ -= 128
        with_acc = (out_dtype != jnp.dtype(jnp.float32))
        while kstream_bytes(tm_, tk_, with_acc) > budget and tm_ > 128:
            tm_ = max(128, ((tm_ // 2) // 8) * 8)
        while kstream_bytes(tm_, tk_, with_acc) > budget and tk_ > 128:
            tk_half = max(128, ((tk_ // 2) // 128) * 128)
            while K % tk_half != 0:
                tk_half -= 128
            if tk_half == tk_:
                break
            tk_ = tk_half
        needed = kstream_bytes(tm_, tk_, with_acc)

    # Pad rows up to a tile multiple (zeros; epilogue stays finite), slice after.
    M_pad = _round_up(M, tm_)
    if M_pad != M:
        x2 = jnp.pad(x2, ((0, M_pad - M), (0, 0)))

    vmem_limit = min(int(cap * 0.96),
                     max(needed + needed // 4 + (2 << 20), 16 << 20))

    cost = pl.CostEstimate(
        flops=2 * M_pad * K * N + 8 * M_pad * N,
        transcendentals=M_pad * N,                       # sigmoid
        bytes_accessed=(M_pad * K * xbytes + K * N * wbytes
                        + M_pad * N * obytes + 3 * N * 4))

    if use_resident:
        kernel = functools.partial(_resident_kernel, eps=eps)
        out = pl.pallas_call(
            kernel,
            out_shape=jax.ShapeDtypeStruct((M_pad, N), out_dtype),
            grid_spec=pltpu.PrefetchScalarGridSpec(
                num_scalar_prefetch=0,
                grid=(M_pad // tm_,),
                in_specs=[
                    pl.BlockSpec((tm_, K), lambda i: (i, 0)),   # x row tile
                    pl.BlockSpec((K, N), lambda i: (0, 0)),     # W resident (1 DMA)
                    pl.BlockSpec((1, N), lambda i: (0, 0)),     # bias
                    pl.BlockSpec((1, N), lambda i: (0, 0)),     # LN gamma
                    pl.BlockSpec((1, N), lambda i: (0, 0)),     # LN beta
                ],
                out_specs=pl.BlockSpec((tm_, N), lambda i: (i, 0)),
            ),
            compiler_params=pltpu.CompilerParams(
                dimension_semantics=("parallel",),
                vmem_limit_bytes=vmem_limit),
            cost_estimate=cost,
        )(x2, w, b2, g2, beta2)
    else:
        if with_acc:
            kernel = functools.partial(_kstream_kernel_scratch, eps=eps)
            scratch = [pltpu.VMEM((tm_, N), jnp.float32)]
        else:
            kernel = functools.partial(_kstream_kernel_f32out, eps=eps)
            scratch = []
        out = pl.pallas_call(
            kernel,
            out_shape=jax.ShapeDtypeStruct((M_pad, N), out_dtype),
            grid_spec=pltpu.PrefetchScalarGridSpec(
                num_scalar_prefetch=0,
                grid=(M_pad // tm_, K // tk_),
                in_specs=[
                    pl.BlockSpec((tm_, tk_), lambda i, k: (i, k)),  # x tile
                    pl.BlockSpec((tk_, N), lambda i, k: (k, 0)),    # W K-slab
                    pl.BlockSpec((1, N), lambda i, k: (0, 0)),      # bias
                    pl.BlockSpec((1, N), lambda i, k: (0, 0)),      # LN gamma
                    pl.BlockSpec((1, N), lambda i, k: (0, 0)),      # LN beta
                ],
                out_specs=pl.BlockSpec((tm_, N), lambda i, k: (i, 0)),
                scratch_shapes=scratch,
            ),
            compiler_params=pltpu.CompilerParams(
                dimension_semantics=("parallel", "arbitrary"),
                vmem_limit_bytes=vmem_limit),
            cost_estimate=cost,
        )(x2, w, b2, g2, beta2)

    if M_pad != M:
        out = out[:M]
    return out.reshape(*orig_shape[:-1], N)


# ----------------------------------------------------------------------------
# Module wrapper mirroring the PyTorch PredictionHeadTransform
# ----------------------------------------------------------------------------
class PredictionHeadTransformPallas:
    def __init__(self, d_model, key, eps=1e-5, param_dtype=jnp.bfloat16):
        self.d_model = d_model
        self.eps = eps
        kw, kb = jax.random.split(key)
        bound = 1.0 / math.sqrt(d_model)
        # Weight stored as [d_in, d_out] (= torch nn.Linear weight.T), pre-cast
        # to param_dtype (bf16 default -> half W DMA/VMEM, full-rate MXU,
        # f32 accumulation in-kernel).  Note bf16 weights will not bit-match an
        # f32 reference; pass param_dtype=jnp.float32 for exact numerics.
        self.w = jax.random.uniform(kw, (d_model, d_model), jnp.float32,
                                    -bound, bound).astype(param_dtype)
        self.b = jax.random.uniform(kb, (d_model,), jnp.float32, -bound, bound)
        # LayerNorm params (torch defaults: gamma=1, beta=0, eps=1e-5)
        self.gamma = jnp.ones((d_model,), jnp.float32)
        self.beta = jnp.zeros((d_model,), jnp.float32)

    def __call__(self, hidden_states, **kwargs):
        return prediction_head_transform(
            hidden_states, self.w, self.b, self.gamma, self.beta,
            eps=self.eps, **kwargs)


def _reference(x, w, b, gamma, beta, eps):
    h = x @ w.astype(jnp.float32) + b
    h = h * jax.nn.sigmoid(h)
    mean = h.mean(-1, keepdims=True)
    var = ((h - mean) ** 2).mean(-1, keepdims=True)
    return (h - mean) * jax.lax.rsqrt(var + eps) * gamma + beta


if __name__ == "__main__":
    B, S, D_MODEL = 2, 8, 32
    root = jax.random.PRNGKey(0)
    k_params, k_x, k_x2 = jax.random.split(root, 3)

    x_in = jax.random.normal(k_x, (B, S, D_MODEL), jnp.float32)

    # 1) f32 params, resident-W path: must match the reference tightly.
    mod_f32 = PredictionHeadTransformPallas(D_MODEL, k_params,
                                            param_dtype=jnp.float32)
    y = jax.block_until_ready(mod_f32(x_in))
    assert y.shape == (B, S, D_MODEL)
    assert bool(jnp.all(jnp.isfinite(y)))
    y_ref = _reference(x_in, mod_f32.w, mod_f32.b, mod_f32.gamma,
                       mod_f32.beta, mod_f32.eps)
    assert bool(jnp.allclose(y, y_ref, rtol=1e-5, atol=1e-5)), (
        float(jnp.max(jnp.abs(y - y_ref))))

    # 2) Default bf16-weight path (f32 accumulation): loose tolerance.
    mod_bf16 = PredictionHeadTransformPallas(D_MODEL, k_params)  # bf16 weights
    y_bf = jax.block_until_ready(mod_bf16(x_in))
    y_ref_bf = _reference(x_in, mod_bf16.w, mod_bf16.b, mod_bf16.gamma,
                          mod_bf16.beta, mod_bf16.eps)
    assert bool(jnp.allclose(y_bf, y_ref_bf, rtol=5e-2, atol=5e-2)), (
        float(jnp.max(jnp.abs(y_bf - y_ref_bf))))

    # 3) K-streamed path (forced) with a ragged row count -> exercises padding
    #    and the accumulate-into-o_ref (no scratch) variant.
    D2 = 256
    mod2 = PredictionHeadTransformPallas(D2, k_params, param_dtype=jnp.float32)
    x2_in = jax.random.normal(k_x2, (3, 7, D2), jnp.float32)     # M = 21
    y2 = jax.block_until_ready(mod2(x2_in, force_kstream=True, tk=128))
    y2_ref = _reference(x2_in, mod2.w, mod2.b, mod2.gamma, mod2.beta, mod2.eps)
    assert y2.shape == (3, 7, D2)
    assert bool(jnp.allclose(y2, y2_ref, rtol=1e-5, atol=1e-5)), (
        float(jnp.max(jnp.abs(y2 - y2_ref))))

    print("KERNEL_OK")
</pallas_src>

<mosaic_0001>
module attributes {stable_mosaic.version = 11 : i64} {
  func.func @_resident_kernel(%arg0: i32, %arg1: memref<8x32xf32, #tpu.memory_space<vmem>>, %arg2: memref<32x32xf32, #tpu.memory_space<vmem>>, %arg3: memref<1x32xf32, #tpu.memory_space<vmem>>, %arg4: memref<1x32xf32, #tpu.memory_space<vmem>>, %arg5: memref<1x32xf32, #tpu.memory_space<vmem>>, %arg6: memref<8x32xf32, #tpu.memory_space<vmem>>) attributes {dimension_semantics = [#tpu.dimension_semantics<parallel>], iteration_bounds = array<i64: 2>, scalar_prefetch = 0 : i64, scratch_operands = 0 : i64, tpu.core_type = #tpu.core_type<tc>, window_params = [{transform_indices = @transform_0, window_bounds = array<i64: 8, 32>}, {pipeline_mode = #tpu.pipeline_mode<synchronous>, transform_indices = @transform_1, window_bounds = array<i64: 32, 32>}, {pipeline_mode = #tpu.pipeline_mode<synchronous>, transform_indices = @transform_2, window_bounds = array<i64: 1, 32>}, {pipeline_mode = #tpu.pipeline_mode<synchronous>, transform_indices = @transform_3, window_bounds = array<i64: 1, 32>}, {pipeline_mode = #tpu.pipeline_mode<synchronous>, transform_indices = @transform_4, window_bounds = array<i64: 1, 32>}, {transform_indices = @transform_5, window_bounds = array<i64: 8, 32>}]} {
    %c0 = arith.constant 0 : index
    %c0_0 = arith.constant 0 : index
    %0 = vector.load %arg1[%c0, %c0_0] : memref<8x32xf32, #tpu.memory_space<vmem>>, vector<8x32xf32>
    %c0_1 = arith.constant 0 : index
    %c0_2 = arith.constant 0 : index
    %1 = vector.load %arg2[%c0_1, %c0_2] : memref<32x32xf32, #tpu.memory_space<vmem>>, vector<32x32xf32>
    %cst = arith.constant dense<0.000000e+00> : vector<8x32xf32>
    %2 = tpu.matmul %0, %1, %cst {dimension_numbers = #tpu.dot_dimension_numbers<[1], [0], [0], [1], [0, 0, 1, 1], [], []>} : vector<8x32xf32>, vector<32x32xf32>, vector<8x32xf32> -> vector<8x32xf32>
    %c0_3 = arith.constant 0 : index
    %c0_4 = arith.constant 0 : index
    %3 = vector.load %arg3[%c0_3, %c0_4] : memref<1x32xf32, #tpu.memory_space<vmem>>, vector<1x32xf32>
    %4 = vector.broadcast %3 : vector<1x32xf32> to vector<8x32xf32>
    %5 = arith.addf %2, %4 : vector<8x32xf32>
    %6 = arith.negf %5 : vector<8x32xf32>
    %7 = math.exp %6 : vector<8x32xf32>
    %cst_5 = arith.constant 1.000000e+00 : f32
    %8 = vector.broadcast %cst_5 : f32 to vector<8x32xf32>
    %9 = arith.addf %8, %7 : vector<8x32xf32>
    %10 = arith.divf %8, %9 : vector<8x32xf32>
    %11 = arith.mulf %5, %10 : vector<8x32xf32>
    %cst_6 = arith.constant dense<0.000000e+00> : vector<8xf32>
    %12 = vector.multi_reduction <add>, %11, %cst_6 [1] : vector<8x32xf32> to vector<8xf32>
    %13 = vector.shape_cast %12 : vector<8xf32> to vector<8x1xf32>
    %cst_7 = arith.constant 3.200000e+01 : f32
    %14 = vector.broadcast %cst_7 : f32 to vector<8x1xf32>
    %15 = arith.divf %13, %14 : vector<8x1xf32>
    %16 = vector.broadcast %15 : vector<8x1xf32> to vector<8x32xf32>
    %17 = arith.subf %11, %16 : vector<8x32xf32>
    %18 = arith.mulf %17, %17 : vector<8x32xf32>
    %cst_8 = arith.constant dense<0.000000e+00> : vector<8xf32>
    %19 = vector.multi_reduction <add>, %18, %cst_8 [1] : vector<8x32xf32> to vector<8xf32>
    %20 = vector.shape_cast %19 : vector<8xf32> to vector<8x1xf32>
    %cst_9 = arith.constant 3.200000e+01 : f32
    %21 = vector.broadcast %cst_9 : f32 to vector<8x1xf32>
    %22 = arith.divf %20, %21 : vector<8x1xf32>
    %cst_10 = arith.constant 9.99999974E-6 : f32
    %23 = vector.broadcast %cst_10 : f32 to vector<8x1xf32>
    %24 = arith.addf %22, %23 : vector<8x1xf32>
    %25 = math.rsqrt %24 : vector<8x1xf32>
    %26 = vector.broadcast %25 : vector<8x1xf32> to vector<8x32xf32>
    %27 = arith.mulf %17, %26 : vector<8x32xf32>
    %c0_11 = arith.constant 0 : index
    %c0_12 = arith.constant 0 : index
    %28 = vector.load %arg4[%c0_11, %c0_12] : memref<1x32xf32, #tpu.memory_space<vmem>>, vector<1x32xf32>
    %29 = vector.broadcast %28 : vector<1x32xf32> to vector<8x32xf32>
    %30 = arith.mulf %27, %29 : vector<8x32xf32>
    %c0_13 = arith.constant 0 : index
    %c0_14 = arith.constant 0 : index
    %31 = vector.load %arg5[%c0_13, %c0_14] : memref<1x32xf32, #tpu.memory_space<vmem>>, vector<1x32xf32>
    %32 = vector.broadcast %31 : vector<1x32xf32> to vector<8x32xf32>
    %33 = arith.addf %30, %32 : vector<8x32xf32>
    %c0_15 = arith.constant 0 : index
    %c0_16 = arith.constant 0 : index
    %34 = vector.load %arg6[%c0_15, %c0_16] : memref<8x32xf32, #tpu.memory_space<vmem>>, vector<8x32xf32>
    tpu.vector_store %arg6[%c0_15, %c0_16], %33 {strides = array<i32>} : memref<8x32xf32, #tpu.memory_space<vmem>>, vector<8x32xf32>,
    return
  }
  func.func @transform_0(%arg0: i32) -> (i32, i32) {
    %c0_i32 = arith.constant 0 : i32
    %c0_i32_0 = arith.constant 0 : i32
    return %arg0, %c0_i32 : i32, i32
  }
  func.func @transform_1(%arg0: i32) -> (i32, i32) {
    %c0_i32 = arith.constant 0 : i32
    %c0_i32_0 = arith.constant 0 : i32
    %c0_i32_1 = arith.constant 0 : i32
    return %c0_i32, %c0_i32_0 : i32, i32
  }
  func.func @transform_2(%arg0: i32) -> (i32, i32) {
    %c0_i32 = arith.constant 0 : i32
    %c0_i32_0 = arith.constant 0 : i32
    %c0_i32_1 = arith.constant 0 : i32
    return %c0_i32, %c0_i32_0 : i32, i32
  }
  func.func @transform_3(%arg0: i32) -> (i32, i32) {
    %c0_i32 = arith.constant 0 : i32
    %c0_i32_0 = arith.constant 0 : i32
    %c0_i32_1 = arith.constant 0 : i32
    return %c0_i32, %c0_i32_0 : i32, i32
  }
  func.func @transform_4(%arg0: i32) -> (i32, i32) {
    %c0_i32 = arith.constant 0 : i32
    %c0_i32_0 = arith.constant 0 : i32
    %c0_i32_1 = arith.constant 0 : i32
    return %c0_i32, %c0_i32_0 : i32, i32
  }
  func.func @transform_5(%arg0: i32) -> (i32, i32) {
    %c0_i32 = arith.constant 0 : i32
    %c0_i32_0 = arith.constant 0 : i32
    return %arg0, %c0_i32 : i32, i32
  }
}

</mosaic_0001>

<llo_original>
// kernel: tpu_custom_call.1
$region0: #{tpu_custom_call.1}
  #allocation0 [shape = 'u32[]', space=smem, size = 0x4, offset = 0x4, fixed_abs, tag = 'smem constant byte address 0x4 - core index']
  #allocation1 [shape = 'u32[144,128]{1,0:T(1,128)}', space=vmem, size = 0x12000, scoped, tag = 'internal scratch']
  %s0 = inlined_call_operand.hbm [shape: f32[16,32], index: 0, kind: input, shape index: {}]
  %s1 = inlined_call_operand.hbm [shape: f32[32,32], index: 1, kind: input, shape index: {}]
  %s2 = inlined_call_operand.vmem [shape: f32[1,32], index: 2, kind: input, shape index: {}]
  %s3 = inlined_call_operand.vmem [shape: f32[1,32], index: 3, kind: input, shape index: {}]
  %s4 = inlined_call_operand.vmem [shape: f32[1,32], index: 4, kind: input, shape index: {}]
  %s5 = inlined_call_operand.hbm [shape: f32[16,32], index: 5, kind: output, shape index: {}]
  %s6 = sld [smem:[#allocation0]]
  $region61: #{tpu_custom_call.1} parent=0
    _
  %s8 = ssub.s32 1, %s6
  %s9 = scalar_select 0, %s8, %s6
  $region1: #{tpu_custom_call.1} parent=0
    #allocation2 [shape = 'u8[8192]{0}', space=vmem, size = 0x2000, scoped, tag = 'input window, operand 0']
    #allocation3 [shape = 's32[2]{0}', space=sflag, size = 0x8, scoped, tag = 'scoped memory for tpu_custom_call.1']
    #allocation4 [shape = 's32[2]{0}', space=sflag, size = 0x8, scoped, tag = 'scoped memory for tpu_custom_call.1']
    #allocation5 [shape = 'u8[16384]{0}', space=vmem, size = 0x4000, scoped, tag = 'input window, operand 1, single buffered']
    #allocation6 [shape = 's32[1]{0}', space=sflag, size = 0x4, scoped, tag = 'scoped memory for tpu_custom_call.1']
    #allocation7 [shape = 'u8[8192]{0}', space=vmem, size = 0x2000, scoped, tag = 'output window, operand 0']
    %10 = vsyncpa [#allocation3], 0
    %s11 = scalar_lea.sflag [#allocation3], 1
    %12 = vsyncpa %s11, 0
    %13 = vsyncpa [#allocation6], 0
    %14 = vsyncpa [#allocation4], 0
    %s15 = scalar_lea.sflag [#allocation4], 1
    %16 = vsyncpa %s15, 0
    loop: start=0, step=1, limit=4
    $region2: #{tpu_custom_call.1} parent=1 // loop_pre_header
      _
    $region3: #{tpu_custom_call.1} parent=1 // loop_header
      %s18 = sphi 0, %s22
      %p19 = scmp.ge.s32.totalorder %s18, 4
      %s28 = sphi 0, %s30
      %s31 = sphi 0, %s28
      %s32 = sphi 0, %s31
      %s48 = sphi 0, %s32
      %s52 = sphi 0, %s52
      %s54 = sphi 0, %s52
      %s55 = sphi 0, %s54
      %s69 = sphi 0, %s55
      %s73 = sphi 0, %s73
      %s75 = sphi 0, %s73
      %s76 = sphi 0, %s75
      %s90 = sphi 0, %s76
      %s94 = sphi 0, %s94
      %s96 = sphi 0, %s94
      %s97 = sphi 0, %s96
      %s111 = sphi 0, %s97
      %s115 = sphi 0, %s115
      %s117 = sphi 0, %s115
      %s118 = sphi 0, %s117
      %s132 = sphi 0, %s118
      %s138 = sphi 0, %s140
      %s141 = sphi 0, %s138
      %s142 = sphi 0, %s141
      %s158 = sphi 0, %s142
    $region4: #{tpu_custom_call.1} parent=1 // loop_header_branch
      %21 = sbr.rel (%p19) target = $region8
    $region5: #{tpu_custom_call.1} parent=1 // loop_body
      %s23 = ssub.s32 %s18, 1
      %s24 = ssub.s32 %s18, 2
      %s25 = sadd.s32 %s18, 1
      %s26 = ssub.s32 %s18, %s25
      %p27 = scmp.eq.s32.totalorder %s26, 0
      %s29 = sadd.s32 %s28, 1
      %s30 = scalar_select %p27, %s28, %s29
      %p33 = pneg %p27
      %p34 = scmp.eq.s32.totalorder %s18, 1
      %p35 = por %p33, %p34
      %p36 = scmp.ne.s32.totalorder %s28, %s31
      %p37 = scmp.eq.s32.totalorder %s18, 0
      %p38 = por %p36, %p37
      %p39 = scmp.ne.s32.totalorder %s28, %s31
      %p40 = scmp.eq.s32.totalorder %s23, 1
      %p41 = por %p39, %p40
      %p42 = scmp.ne.s32.totalorder %s31, %s32
      %p43 = scmp.eq.s32.totalorder %s23, 0
      %p44 = por %p42, %p43
      %p45 = scmp.ne.s32.totalorder %s31, %s32
      %p46 = scmp.eq.s32.totalorder %s24, 1
      %p47 = por %p45, %p46
      %p49 = scmp.ne.s32.totalorder %s32, %s48
      %p50 = scmp.eq.s32.totalorder %s24, 0
      %p51 = por %p49, %p50
      %s53 = sadd.s32 %s52, 1
      %p56 = scmp.eq.s32.totalorder %s18, 1
      %p57 = scmp.ne.s32.totalorder %s52, %s54
      %p58 = scmp.eq.s32.totalorder %s18, 0
      %p59 = por %p57, %p58
      %p60 = scmp.ne.s32.totalorder %s52, %s54
      %p61 = scmp.eq.s32.totalorder %s23, 1
      %p62 = por %p60, %p61
      %p63 = scmp.ne.s32.totalorder %s54, %s55
      %p64 = scmp.eq.s32.totalorder %s23, 0
      %p65 = por %p63, %p64
      %p66 = scmp.ne.s32.totalorder %s54, %s55
      %p67 = scmp.eq.s32.totalorder %s24, 1
      %p68 = por %p66, %p67
      %p70 = scmp.ne.s32.totalorder %s55, %s69
      %p71 = scmp.eq.s32.totalorder %s24, 0
      %p72 = por %p70, %p71
      %s74 = sadd.s32 %s73, 1
      %p77 = scmp.eq.s32.totalorder %s18, 1
      %p78 = scmp.ne.s32.totalorder %s73, %s75
      %p79 = scmp.eq.s32.totalorder %s18, 0
      %p80 = por %p78, %p79
      %p81 = scmp.ne.s32.totalorder %s73, %s75
      %p82 = scmp.eq.s32.totalorder %s23, 1
      %p83 = por %p81, %p82
      %p84 = scmp.ne.s32.totalorder %s75, %s76
      %p85 = scmp.eq.s32.totalorder %s23, 0
      %p86 = por %p84, %p85
      %p87 = scmp.ne.s32.totalorder %s75, %s76
      %p88 = scmp.eq.s32.totalorder %s24, 1
      %p89 = por %p87, %p88
      %p91 = scmp.ne.s32.totalorder %s76, %s90
      %p92 = scmp.eq.s32.totalorder %s24, 0
      %p93 = por %p91, %p92
      %s95 = sadd.s32 %s94, 1
      %p98 = scmp.eq.s32.totalorder %s18, 1
      %p99 = scmp.ne.s32.totalorder %s94, %s96
      %p100 = scmp.eq.s32.totalorder %s18, 0
      %p101 = por %p99, %p100
      %p102 = scmp.ne.s32.totalorder %s94, %s96
      %p103 = scmp.eq.s32.totalorder %s23, 1
      %p104 = por %p102, %p103
      %p105 = scmp.ne.s32.totalorder %s96, %s97
      %p106 = scmp.eq.s32.totalorder %s23, 0
      %p107 = por %p105, %p106
      %p108 = scmp.ne.s32.totalorder %s96, %s97
      %p109 = scmp.eq.s32.totalorder %s24, 1
      %p110 = por %p108, %p109
      %p112 = scmp.ne.s32.totalorder %s97, %s111
      %p113 = scmp.eq.s32.totalorder %s24, 0
      %p114 = por %p112, %p113
      %s116 = sadd.s32 %s115, 1
      %p119 = scmp.eq.s32.totalorder %s18, 1
      %p120 = scmp.ne.s32.totalorder %s115, %s117
      %p121 = scmp.eq.s32.totalorder %s18, 0
      %p122 = por %p120, %p121
      %p123 = scmp.ne.s32.totalorder %s115, %s117
      %p124 = scmp.eq.s32.totalorder %s23, 1
      %p125 = por %p123, %p124
      %p126 = scmp.ne.s32.totalorder %s117, %s118
      %p127 = scmp.eq.s32.totalorder %s23, 0
      %p128 = por %p126, %p127
      %p129 = scmp.ne.s32.totalorder %s117, %s118
      %p130 = scmp.eq.s32.totalorder %s24, 1
      %p131 = por %p129, %p130
      %p133 = scmp.ne.s32.totalorder %s118, %s132
      %p134 = scmp.eq.s32.totalorder %s24, 0
      %p135 = por %p133, %p134
      %s136 = ssub.s32 %s18, %s25
      %p137 = scmp.eq.s32.totalorder %s136, 0
      %s139 = sadd.s32 %s138, 1
      %s140 = scalar_select %p137, %s138, %s139
      %p143 = pneg %p137
      %p144 = scmp.eq.s32.totalorder %s18, 1
      %p145 = por %p143, %p144
      %p146 = scmp.ne.s32.totalorder %s138, %s141
      %p147 = scmp.eq.s32.totalorder %s18, 0
      %p148 = por %p146, %p147
      %p149 = scmp.ne.s32.totalorder %s138, %s141
      %p150 = scmp.eq.s32.totalorder %s23, 1
      %p151 = por %p149, %p150
      %p152 = scmp.ne.s32.totalorder %s141, %s142
      %p153 = scmp.eq.s32.totalorder %s23, 0
      %p154 = por %p152, %p153
      %p155 = scmp.ne.s32.totalorder %s141, %s142
      %p156 = scmp.eq.s32.totalorder %s24, 1
      %p157 = por %p155, %p156
      %p159 = scmp.ne.s32.totalorder %s142, %s158
      %p160 = scmp.eq.s32.totalorder %s24, 0
      %p161 = por %p159, %p160
      %p162 = scmp.le.s32.totalorder 1, %s18
      %p163 = scmp.lt.s32.totalorder %s18, 3
      %p164 = pnand %p162, %p163
      %p165 = pneg %p164
      // Predicated region
      $region9: #{tpu_custom_call.1} parent=5 // pred_check
        _
      $region10: #{tpu_custom_call.1} parent=5 // pred_check_branch
        %167 = sbr.rel (%p164) target = $region12
      $region11: #{tpu_custom_call.1} parent=5 // pred_region
        %s168 = ssub.s32 %s18, 1
        // Predicated region
        $region13: #{tpu_custom_call.1} parent=11 // pred_check
          %p169 = pneg %p65
        $region14: #{tpu_custom_call.1} parent=11 // pred_check_branch
          %171 = sbr.rel (%p169) target = $region16
        $region15: #{tpu_custom_call.1} parent=11 // pred_region
          %s173 = ssub.s32 512, 512
          %174 = vsyncadd [#allocation6], %s173
          %s175 = sshll.u32 [#allocation5], 4
          %s176 = int_to_ptr.vmem [resolvable:$true] %s175
          %181 = dma.hbm_to_vmem [thread:$0]  %s1, 512, %s176, [#allocation6], 128, 128, 8
        $region16: #{tpu_custom_call.1} parent=11 // pred_fallthru
          _
        // Predicated region
        $region17: #{tpu_custom_call.1} parent=11 // pred_check
          %p182 = pneg %p86
        $region18: #{tpu_custom_call.1} parent=11 // pred_check_branch
          %184 = sbr.rel (%p182) target = $region20
        $region19: #{tpu_custom_call.1} parent=11 // pred_region
          _
        $region20: #{tpu_custom_call.1} parent=11 // pred_fallthru
          _
        // Predicated region
        $region21: #{tpu_custom_call.1} parent=11 // pred_check
          %p185 = pneg %p107
        $region22: #{tpu_custom_call.1} parent=11 // pred_check_branch
          %187 = sbr.rel (%p185) target = $region24
        $region23: #{tpu_custom_call.1} parent=11 // pred_region
          _
        $region24: #{tpu_custom_call.1} parent=11 // pred_fallthru
          _
        // Predicated region
        $region25: #{tpu_custom_call.1} parent=11 // pred_check
          %p188 = pneg %p128
        $region26: #{tpu_custom_call.1} parent=11 // pred_check_branch
          %190 = sbr.rel (%p188) target = $region28
        $region27: #{tpu_custom_call.1} parent=11 // pred_region
          _
        $region28: #{tpu_custom_call.1} parent=11 // pred_fallthru
          _
      $region12: #{tpu_custom_call.1} parent=5 // pred_fallthru
        _
      %p191 = scmp.lt.s32.totalorder %s18, 2
      // Predicated region
      $region29: #{tpu_custom_call.1} parent=5 // pred_check
        %p192 = pneg %p191
      $region30: #{tpu_custom_call.1} parent=5 // pred_check_branch
        %194 = sbr.rel (%p192) target = $region32
      $region31: #{tpu_custom_call.1} parent=5 // pred_region
        // Predicated region
        $region33: #{tpu_custom_call.1} parent=31 // pred_check
          %p195 = pneg %p38
        $region34: #{tpu_custom_call.1} parent=31 // pred_check_branch
          %197 = sbr.rel (%p195) target = $region36
        $region35: #{tpu_custom_call.1} parent=31 // pred_region
          %s198 = sand.u32 %s28, 1
          %s199 = scalar_lea.sflag [#allocation3], %s198
          %s200 = sand.u32 %s28, 1
          %s201 = smul.addr %s200, 8
          %s202 = scalar_lea.vmem [#allocation2], %s201
          %s204 = ssub.s32 128, 128
          %205 = vsyncadd %s199, %s204
          %s206 = smul.addr %s18, 128
          %s207 = scalar_lea.hbm %s0, %s206
          %s209 = sshll.u32 %s202, 4
          %s210 = int_to_ptr.vmem [resolvable:$true] %s209
          %212 = dma.hbm_to_vmem [thread:$0]  %s207, 128, %s210, %s199
        $region36: #{tpu_custom_call.1} parent=31 // pred_fallthru
          _
      $region32: #{tpu_custom_call.1} parent=5 // pred_fallthru
        _
      %p213 = scmp.le.s32.totalorder 1, %s18
      %p214 = scmp.lt.s32.totalorder %s18, 3
      %p215 = pnand %p213, %p214
      %p216 = pneg %p215
      // Predicated region
      $region37: #{tpu_custom_call.1} parent=5 // pred_check
        _
      $region38: #{tpu_custom_call.1} parent=5 // pred_check_branch
        %218 = sbr.rel (%p215) target = $region40
      $region39: #{tpu_custom_call.1} parent=5 // pred_region
        %s219 = ssub.s32 %s18, 1
        %s220 = sand.u32 %s31, 1
        %s221 = scalar_lea.sflag [#allocation3], %s220
        %s222 = sand.u32 %s31, 1
        %s223 = smul.addr %s222, 8
        %s224 = scalar_lea.vmem [#allocation2], %s223
        // Predicated region
        $region41: #{tpu_custom_call.1} parent=39 // pred_check
          %p225 = pneg %p44
        $region42: #{tpu_custom_call.1} parent=39 // pred_check_branch
          %227 = sbr.rel (%p225) target = $region44
        $region43: #{tpu_custom_call.1} parent=39 // pred_region
          %228 = dma.done %s221, 128
        $region44: #{tpu_custom_call.1} parent=39 // pred_fallthru
          _
        // Predicated region
        $region45: #{tpu_custom_call.1} parent=39 // pred_check
          %p229 = pneg %p65
        $region46: #{tpu_custom_call.1} parent=39 // pred_check_branch
          %231 = sbr.rel (%p229) target = $region48
        $region47: #{tpu_custom_call.1} parent=39 // pred_region
          %232 = dma.done [#allocation6], 512
        $region48: #{tpu_custom_call.1} parent=39 // pred_fallthru
          _
        %s233 = sand.u32 %s31, 1
        %s234 = scalar_lea.sflag [#allocation3], %s233
        %s235 = sand.u32 %s31, 1
        %s236 = smul.addr %s235, 8
        %s237 = scalar_lea.vmem [#allocation2], %s236
        %p238 = pneg %p44
        %p239 = pneg %p41
        %p240 = pneg %p65
        %p241 = pneg %p62
        %p242 = pneg %p86
        %p243 = pneg %p83
        %p244 = pneg %p107
        %p245 = pneg %p104
        %p246 = pneg %p128
        %p247 = pneg %p125
        %p248 = pneg %p154
        %p249 = pneg %p151
        %s250 = sand.u32 %s141, 1
        %s251 = scalar_lea.sflag [#allocation4], %s250
        %s252 = sand.u32 %s141, 1
        %s253 = smul.addr %s252, 8
        %s254 = scalar_lea.vmem [#allocation7], %s253
        %v255 = vld [vmem:[%s224] sm:$0xff]
        %v256 = vld [vmem:[#allocation5] sm:$0xff]
        %v257 = vld [vmem:[#allocation5 + $0x8] sm:$0xff]
        %v258 = vld [vmem:[#allocation5 + $0x10] sm:$0xff]
        %v259 = vld [vmem:[#allocation5 + $0x18] sm:$0xff]
        %v260 = vld [vmem:[%s2] sm:$0x1]
        %v262 = vlaneseq
        %v263 = vshrl.u32 %v262, 7
        %v264 = vsub.s32 0, %v263
        %v265 = vrot.slane %v260, %v264
        %vm267 = vcmask 261120
        %v269 = vsel %vm267, %v255, 0
        %271 = vmatprep.subr.mxu0 0.0
        %272 = vmatpush1.msra.mxu0 0.0
        %273 = vmatprep.subr.mxu0 0.0
        %274 = vmatpush1.msra.mxu0 0.0
        %275 = vmatprep.subr.mxu0 0.0
        %276 = vmatpush1.msra.mxu0 0.0
        %277 = vmatprep.subr.mxu0 0.0
        %278 = vmatpush1.msra.mxu0 0.0
        %279 = vmatprep.subr.mxu0 0.0
        %280 = vmatpush1.msra.mxu0 0.0
        %281 = vmatprep.subr.mxu0 0.0
        %282 = vmatpush1.msra.mxu0 0.0
        %283 = vmatprep.subr.mxu0 0.0
        %284 = vmatpush1.msra.mxu0 0.0
        %285 = vmatprep.subr.mxu0 0.0
        %286 = vmatpush1.msra.mxu0 0.0
        %287 = vmatprep.subr.mxu0 0.0
        %288 = vmatpush1.msra.mxu0 0.0
        %289 = vmatprep.subr.mxu0 0.0
        %290 = vmatpush1.msra.mxu0 0.0
        %291 = vmatprep.subr.mxu0 0.0
        %292 = vmatpush1.msra.mxu0 0.0
        %293 = vmatprep.subr.mxu0 0.0
        %294 = vmatpush1.msra.mxu0 0.0
        %295 = vmatprep.subr.mxu0 0.0
        %296 = vmatpush1.msra.mxu0 %v259
        %297 = vmatprep.subr.mxu0 0.0
        %298 = vmatpush1.msra.mxu0 %v258
        %299 = vmatprep.subr.mxu0 0.0
        %300 = vmatpush1.msra.mxu0 %v257
        %301 = vmatprep.subr.mxu0 0.0
        %302 = vmatpush1.msra.mxu0 %v256
        %303 = vmatprep.subr.mxu0 0.0
        %304 = vmatpush2.msra.mxu0 0.0
        %305 = vmatprep.subr.mxu0 0.0
        %306 = vmatpush2.msra.mxu0 0.0
        %307 = vmatprep.subr.mxu0 0.0
        %308 = vmatpush2.msra.mxu0 0.0
        %309 = vmatprep.subr.mxu0 0.0
        %310 = vmatpush2.msra.mxu0 0.0
        %311 = vmatprep.subr.mxu0 0.0
        %312 = vmatpush2.msra.mxu0 0.0
        %313 = vmatprep.subr.mxu0 0.0
        %314 = vmatpush2.msra.mxu0 0.0
        %315 = vmatprep.subr.mxu0 0.0
        %316 = vmatpush2.msra.mxu0 0.0
        %317 = vmatprep.subr.mxu0 0.0
        %318 = vmatpush2.msra.mxu0 0.0
        %319 = vmatprep.subr.mxu0 0.0
        %320 = vmatpush2.msra.mxu0 0.0
        %321 = vmatprep.subr.mxu0 0.0
        %322 = vmatpush2.msra.mxu0 0.0
        %323 = vmatprep.subr.mxu0 0.0
        %324 = vmatpush2.msra.mxu0 0.0
        %325 = vmatprep.subr.mxu0 0.0
        %326 = vmatpush2.msra.mxu0 0.0
        %327 = vmatprep.subr.mxu0 0.0
        %328 = vmatpush2.msra.mxu0 0.0
        %329 = vmatprep.subr.mxu0 0.0
        %330 = vmatpush2.msra.mxu0 0.0
        %331 = vmatprep.subr.mxu0 0.0
        %332 = vmatpush2.msra.mxu0 0.0
        %333 = vmatprep.subr.mxu0 0.0
        %334 = vmatpush2.msra.mxu0 0.0
        %335 = vmatprep.mubr.f32.mxu0 0.0
        %336 = vmatmul.mubr.f32.gmra.mxu0 %v269
        %v337 = vpop.f32.mrf.mxu0
        %v338 = vadd.f32 %v265, %v337
        %v339 = vpop.f32.mrf.mxu0
        %340 = vdwg.mxu0
        %v341 = vxor.u32 %v338, 2147483648
        %v342 = vmul.f32 %v341, 1.442695
        %v343 = vpow.pop %v342
        %v344 = vadd.f32 %v343, 1.0
        %v345 = vrcp.pop %v344
        %v346 = vmul.f32 1.0, %v345
        %v347 = vmul.f32 %v338, %v346
        %v348 = vsel %vm267, %v347, 0.0
        %349 = vadd.xlane.f32.xlu0 %v348
        %v350 = vpop.xlane.xlu0 %349
        %v351 = vrcp.pop 32.0
        %v352 = vmul.f32 %v350, %v351
        %v353 = vsub.f32 %v347, %v352
        %v354 = vmul.f32 %v353, %v353
        %v355 = vsel %vm267, %v354, 0.0
        %356 = vadd.xlane.f32.xlu0 %v355
        %v357 = vpop.xlane.xlu0 %356
        %v358 = vmul.f32 %v357, %v351
        %v359 = vadd.f32 %v358, 1e-05
        %v360 = vrsqrt.pop %v359
        %v361 = vmul.f32 %v353, %v360
        %v362 = vld [vmem:[%s3] sm:$0x1]
        %v364 = vlaneseq
        %v365 = vshrl.u32 %v364, 7
        %v366 = vsub.s32 0, %v365
        %v367 = vrot.slane %v362, %v366
        %v369 = vmul.f32 %v361, %v367
        %v370 = vld [vmem:[%s4] sm:$0x1]
        %v372 = vlaneseq
        %v373 = vshrl.u32 %v372, 7
        %v374 = vsub.s32 0, %v373
        %v375 = vrot.slane %v370, %v374
        %v377 = vadd.f32 %v369, %v375
        %378 = vst.msk [vmem:[%s254] sm:$0xff] %vm267, %v377
        %s379 = sand.u32 %s141, 1
        %s380 = scalar_lea.sflag [#allocation4], %s379
        %s381 = sand.u32 %s141, 1
        %s382 = smul.addr %s381, 8
        %s383 = scalar_lea.vmem [#allocation7], %s382
        // Predicated region
        $region49: #{tpu_custom_call.1} parent=39 // pred_check
          %p384 = pneg %p151
        $region50: #{tpu_custom_call.1} parent=39 // pred_check_branch
          %386 = sbr.rel (%p384) target = $region52
        $region51: #{tpu_custom_call.1} parent=39 // pred_region
          %s388 = ssub.s32 128, 128
          %389 = vsyncadd %s380, %s388
          %s390 = smul.addr %s23, 128
          %s391 = scalar_lea.hbm %s5, %s390
          %s393 = sshll.u32 %s383, 4
          %s394 = int_to_ptr.vmem [resolvable:$true] %s393
          %396 = dma.vmem_to_hbm [thread:$0]  %s394, 128, %s391, %s380
        $region52: #{tpu_custom_call.1} parent=39 // pred_fallthru
          _
      $region40: #{tpu_custom_call.1} parent=5 // pred_fallthru
        _
      %p397 = scmp.le.s32.totalorder 2, %s18
      // Predicated region
      $region53: #{tpu_custom_call.1} parent=5 // pred_check
        %p398 = pneg %p397
      $region54: #{tpu_custom_call.1} parent=5 // pred_check_branch
        %400 = sbr.rel (%p398) target = $region56
      $region55: #{tpu_custom_call.1} parent=5 // pred_region
        %s401 = ssub.s32 %s18, 2
        // Predicated region
        $region57: #{tpu_custom_call.1} parent=55 // pred_check
          %p402 = pneg %p157
        $region58: #{tpu_custom_call.1} parent=55 // pred_check_branch
          %404 = sbr.rel (%p402) target = $region60
        $region59: #{tpu_custom_call.1} parent=55 // pred_region
          %s405 = sand.u32 %s142, 1
          %s406 = scalar_lea.sflag [#allocation4], %s405
          %s407 = sand.u32 %s142, 1
          %s408 = smul.addr %s407, 8
          %s409 = scalar_lea.vmem [#allocation7], %s408
          %410 = dma.done %s406, 128
        $region60: #{tpu_custom_call.1} parent=55 // pred_fallthru
          _
      $region56: #{tpu_custom_call.1} parent=5 // pred_fallthru
        _
    $region6: #{tpu_custom_call.1} parent=1 // loop_footer
      %s22 = sadd.s32 1, %s18
    $region7: #{tpu_custom_call.1} parent=1 // loop_footer_branch
      %17 = sbr.rel target = $region3
    $region8: #{tpu_custom_call.1} parent=1 // loop_exit
      _
    %411 = vsyncpa [#allocation3], 1
    %s412 = scalar_lea.sflag [#allocation3], 1
    %413 = vsyncpa %s412, 1
    %414 = vsyncpa [#allocation6], 1
    %415 = vsyncpa [#allocation4], 1
    %s416 = scalar_lea.sflag [#allocation4], 1
    %417 = vsyncpa %s416, 1

</llo_original>
